<compile_context>
chip_gen: v5e
topology: v5e:2x2
jax: 0.10.0
libtpu: 0.0.40
codegen_flags: <defaults>
</compile_context>

<pallas_src>
import functools

import jax
import jax.numpy as jnp
from jax.experimental import pallas as pl
from jax.experimental.pallas import tpu as pltpu

DEPTH = 10
FEATURES = 1024  # fixed by the module's __init__ (torch.ones(1024))


def adaparams_kernel(w_ref, b_ref, x_ref, o_ref, *, compute_dtype):
    # w_ref, b_ref: (DEPTH, FEATURES) in VMEM (resident across all grid steps)
    # x_ref, o_ref: (tile_m, FEATURES) in VMEM
    x = x_ref[...].astype(compute_dtype)
    # DEPTH is a static Python constant -> fully unrolled elementwise chain (VPU).
    for i in range(DEPTH - 1):
        w = w_ref[i, :].astype(compute_dtype)
        b = b_ref[i, :].astype(compute_dtype)
        x = jnp.maximum(x * w + b, jnp.zeros((), compute_dtype))
    w = w_ref[DEPTH - 1, :].astype(compute_dtype)
    b = b_ref[DEPTH - 1, :].astype(compute_dtype)
    x = x * w + b
    o_ref[...] = x.astype(o_ref.dtype)


def _round_up(a, m):
    return ((a + m - 1) // m) * m


def adaparams_forward(x, weights, biases, *, tile_m=1024,
                      compute_dtype=jnp.float32):
    """x: (B, FEATURES); weights, biases: (DEPTH, FEATURES).

    compute_dtype=jnp.bfloat16 is a valid option on v6e/v7x (VALU-bound once
    HBM is no longer the limiter) but changes numerics vs the f32 reference.
    """
    B, F = x.shape
    assert F == FEATURES

    # Effective tile: large enough to amortize per-step overhead, small enough
    # to keep >= 2 grid steps when B allows (v7x dual TensorCore), and a
    # multiple of 8 sublanes.
    if B >= 16:
        tm = min(tile_m, _round_up(max(B // 2, 8), 8))
    else:
        tm = _round_up(max(B, 1), 8)
    tm = max(tm, 8)

    # Pad batch so it divides evenly into tiles (padded rows are discarded).
    B_pad = _round_up(B, tm)
    x_in = jnp.pad(x, ((0, B_pad - B), (0, 0))) if B_pad != B else x

    grid = (B_pad // tm,)
    kernel = functools.partial(adaparams_kernel, compute_dtype=compute_dtype)

    out = pl.pallas_call(
        kernel,
        out_shape=jax.ShapeDtypeStruct((B_pad, F), x.dtype),
        grid_spec=pl.GridSpec(
            grid=grid,
            in_specs=[
                pl.BlockSpec((DEPTH, FEATURES), lambda i: (0, 0)),   # weights
                pl.BlockSpec((DEPTH, FEATURES), lambda i: (0, 0)),   # biases
                pl.BlockSpec((tm, FEATURES), lambda i: (i, 0)),      # x tile
            ],
            out_specs=pl.BlockSpec((tm, FEATURES), lambda i: (i, 0)),
        ),
        compiler_params=pltpu.CompilerParams(
            dimension_semantics=("parallel",),
            vmem_limit_bytes=48 << 20,  # fits v7x (64 MiB) with headroom
        ),
    )(weights, biases, x_in)

    if B_pad != B:
        out = out[:B]
    return out


def adaparams_reference(x, weights, biases):
    x = x.astype(jnp.float32)
    for i in range(DEPTH - 1):
        x = jnp.maximum(weights[i] * x + biases[i], 0.0)
    return weights[DEPTH - 1] * x + biases[DEPTH - 1]


if __name__ == "__main__":
    key = jax.random.PRNGKey(0)
    kx, kw, kb = jax.random.split(key, 3)

    # Small example input: batch=8 rows, feature dim fixed at 1024 by the module.
    x = jax.random.normal(kx, (8, FEATURES), dtype=jnp.float32)

    # Deterministic parameter init. Module's __init__ uses ones/zeros; add a
    # small deterministic perturbation so the kernel compute is non-trivial,
    # while keeping shapes identical to the module (depth x 1024).
    weights = 1.0 + 0.05 * jax.random.normal(kw, (DEPTH, FEATURES), dtype=jnp.float32)
    biases = 0.05 * jax.random.normal(kb, (DEPTH, FEATURES), dtype=jnp.float32)

    out = adaparams_forward(x, weights, biases)
    out = jax.block_until_ready(out)

    ref = adaparams_reference(x, weights, biases)
    assert out.shape == x.shape and out.dtype == x.dtype
    assert jnp.allclose(out, ref, atol=1e-5, rtol=1e-5), "mismatch vs reference"

    print("KERNEL_OK")
</pallas_src>

<mosaic_0001>
module attributes {stable_mosaic.version = 11 : i64} {
  func.func @adaparams_kernel(%arg0: i32, %arg1: memref<10x1024xf32, #tpu.memory_space<vmem>>, %arg2: memref<10x1024xf32, #tpu.memory_space<vmem>>, %arg3: memref<8x1024xf32, #tpu.memory_space<vmem>>, %arg4: memref<8x1024xf32, #tpu.memory_space<vmem>>) attributes {dimension_semantics = [#tpu.dimension_semantics<parallel>], iteration_bounds = array<i64: 1>, scalar_prefetch = 0 : i64, scratch_operands = 0 : i64, tpu.core_type = #tpu.core_type<tc>, window_params = [{pipeline_mode = #tpu.pipeline_mode<synchronous>, transform_indices = @transform_0, window_bounds = array<i64: 10, 1024>}, {pipeline_mode = #tpu.pipeline_mode<synchronous>, transform_indices = @transform_1, window_bounds = array<i64: 10, 1024>}, {transform_indices = @transform_2, window_bounds = array<i64: 8, 1024>}, {transform_indices = @transform_3, window_bounds = array<i64: 8, 1024>}]} {
    %c0 = arith.constant 0 : index
    %c0_0 = arith.constant 0 : index
    %0 = vector.load %arg3[%c0, %c0_0] : memref<8x1024xf32, #tpu.memory_space<vmem>>, vector<8x1024xf32>
    %c0_1 = arith.constant 0 : index
    %c0_2 = arith.constant 0 : index
    %1 = vector.load %arg1[%c0_1, %c0_2] : memref<10x1024xf32, #tpu.memory_space<vmem>>, vector<1x1024xf32>
    %2 = vector.shape_cast %1 : vector<1x1024xf32> to vector<1024xf32>
    %c0_3 = arith.constant 0 : index
    %c0_4 = arith.constant 0 : index
    %3 = vector.load %arg2[%c0_3, %c0_4] : memref<10x1024xf32, #tpu.memory_space<vmem>>, vector<1x1024xf32>
    %4 = vector.shape_cast %3 : vector<1x1024xf32> to vector<1024xf32>
    %5 = vector.shape_cast %2 : vector<1024xf32> to vector<1x1024xf32>
    %6 = vector.broadcast %5 : vector<1x1024xf32> to vector<8x1024xf32>
    %7 = arith.mulf %0, %6 : vector<8x1024xf32>
    %8 = vector.shape_cast %4 : vector<1024xf32> to vector<1x1024xf32>
    %9 = vector.broadcast %8 : vector<1x1024xf32> to vector<8x1024xf32>
    %10 = arith.addf %7, %9 : vector<8x1024xf32>
    %cst = arith.constant 0.000000e+00 : f32
    %11 = vector.broadcast %cst : f32 to vector<8x1024xf32>
    %12 = arith.maximumf %10, %11 : vector<8x1024xf32>
    %c1 = arith.constant 1 : index
    %c0_5 = arith.constant 0 : index
    %13 = vector.load %arg1[%c1, %c0_5] : memref<10x1024xf32, #tpu.memory_space<vmem>>, vector<1x1024xf32>
    %14 = vector.shape_cast %13 : vector<1x1024xf32> to vector<1024xf32>
    %c1_6 = arith.constant 1 : index
    %c0_7 = arith.constant 0 : index
    %15 = vector.load %arg2[%c1_6, %c0_7] : memref<10x1024xf32, #tpu.memory_space<vmem>>, vector<1x1024xf32>
    %16 = vector.shape_cast %15 : vector<1x1024xf32> to vector<1024xf32>
    %17 = vector.shape_cast %14 : vector<1024xf32> to vector<1x1024xf32>
    %18 = vector.broadcast %17 : vector<1x1024xf32> to vector<8x1024xf32>
    %19 = arith.mulf %12, %18 : vector<8x1024xf32>
    %20 = vector.shape_cast %16 : vector<1024xf32> to vector<1x1024xf32>
    %21 = vector.broadcast %20 : vector<1x1024xf32> to vector<8x1024xf32>
    %22 = arith.addf %19, %21 : vector<8x1024xf32>
    %cst_8 = arith.constant 0.000000e+00 : f32
    %23 = vector.broadcast %cst_8 : f32 to vector<8x1024xf32>
    %24 = arith.maximumf %22, %23 : vector<8x1024xf32>
    %c2 = arith.constant 2 : index
    %c0_9 = arith.constant 0 : index
    %25 = vector.load %arg1[%c2, %c0_9] : memref<10x1024xf32, #tpu.memory_space<vmem>>, vector<1x1024xf32>
    %26 = vector.shape_cast %25 : vector<1x1024xf32> to vector<1024xf32>
    %c2_10 = arith.constant 2 : index
    %c0_11 = arith.constant 0 : index
    %27 = vector.load %arg2[%c2_10, %c0_11] : memref<10x1024xf32, #tpu.memory_space<vmem>>, vector<1x1024xf32>
    %28 = vector.shape_cast %27 : vector<1x1024xf32> to vector<1024xf32>
    %29 = vector.shape_cast %26 : vector<1024xf32> to vector<1x1024xf32>
    %30 = vector.broadcast %29 : vector<1x1024xf32> to vector<8x1024xf32>
    %31 = arith.mulf %24, %30 : vector<8x1024xf32>
    %32 = vector.shape_cast %28 : vector<1024xf32> to vector<1x1024xf32>
    %33 = vector.broadcast %32 : vector<1x1024xf32> to vector<8x1024xf32>
    %34 = arith.addf %31, %33 : vector<8x1024xf32>
    %cst_12 = arith.constant 0.000000e+00 : f32
    %35 = vector.broadcast %cst_12 : f32 to vector<8x1024xf32>
    %36 = arith.maximumf %34, %35 : vector<8x1024xf32>
    %c3 = arith.constant 3 : index
    %c0_13 = arith.constant 0 : index
    %37 = vector.load %arg1[%c3, %c0_13] : memref<10x1024xf32, #tpu.memory_space<vmem>>, vector<1x1024xf32>
    %38 = vector.shape_cast %37 : vector<1x1024xf32> to vector<1024xf32>
    %c3_14 = arith.constant 3 : index
    %c0_15 = arith.constant 0 : index
    %39 = vector.load %arg2[%c3_14, %c0_15] : memref<10x1024xf32, #tpu.memory_space<vmem>>, vector<1x1024xf32>
    %40 = vector.shape_cast %39 : vector<1x1024xf32> to vector<1024xf32>
    %41 = vector.shape_cast %38 : vector<1024xf32> to vector<1x1024xf32>
    %42 = vector.broadcast %41 : vector<1x1024xf32> to vector<8x1024xf32>
    %43 = arith.mulf %36, %42 : vector<8x1024xf32>
    %44 = vector.shape_cast %40 : vector<1024xf32> to vector<1x1024xf32>
    %45 = vector.broadcast %44 : vector<1x1024xf32> to vector<8x1024xf32>
    %46 = arith.addf %43, %45 : vector<8x1024xf32>
    %cst_16 = arith.constant 0.000000e+00 : f32
    %47 = vector.broadcast %cst_16 : f32 to vector<8x1024xf32>
    %48 = arith.maximumf %46, %47 : vector<8x1024xf32>
    %c4 = arith.constant 4 : index
    %c0_17 = arith.constant 0 : index
    %49 = vector.load %arg1[%c4, %c0_17] : memref<10x1024xf32, #tpu.memory_space<vmem>>, vector<1x1024xf32>
    %50 = vector.shape_cast %49 : vector<1x1024xf32> to vector<1024xf32>
    %c4_18 = arith.constant 4 : index
    %c0_19 = arith.constant 0 : index
    %51 = vector.load %arg2[%c4_18, %c0_19] : memref<10x1024xf32, #tpu.memory_space<vmem>>, vector<1x1024xf32>
    %52 = vector.shape_cast %51 : vector<1x1024xf32> to vector<1024xf32>
    %53 = vector.shape_cast %50 : vector<1024xf32> to vector<1x1024xf32>
    %54 = vector.broadcast %53 : vector<1x1024xf32> to vector<8x1024xf32>
    %55 = arith.mulf %48, %54 : vector<8x1024xf32>
    %56 = vector.shape_cast %52 : vector<1024xf32> to vector<1x1024xf32>
    %57 = vector.broadcast %56 : vector<1x1024xf32> to vector<8x1024xf32>
    %58 = arith.addf %55, %57 : vector<8x1024xf32>
    %cst_20 = arith.constant 0.000000e+00 : f32
    %59 = vector.broadcast %cst_20 : f32 to vector<8x1024xf32>
    %60 = arith.maximumf %58, %59 : vector<8x1024xf32>
    %c5 = arith.constant 5 : index
    %c0_21 = arith.constant 0 : index
    %61 = vector.load %arg1[%c5, %c0_21] : memref<10x1024xf32, #tpu.memory_space<vmem>>, vector<1x1024xf32>
    %62 = vector.shape_cast %61 : vector<1x1024xf32> to vector<1024xf32>
    %c5_22 = arith.constant 5 : index
    %c0_23 = arith.constant 0 : index
    %63 = vector.load %arg2[%c5_22, %c0_23] : memref<10x1024xf32, #tpu.memory_space<vmem>>, vector<1x1024xf32>
    %64 = vector.shape_cast %63 : vector<1x1024xf32> to vector<1024xf32>
    %65 = vector.shape_cast %62 : vector<1024xf32> to vector<1x1024xf32>
    %66 = vector.broadcast %65 : vector<1x1024xf32> to vector<8x1024xf32>
    %67 = arith.mulf %60, %66 : vector<8x1024xf32>
    %68 = vector.shape_cast %64 : vector<1024xf32> to vector<1x1024xf32>
    %69 = vector.broadcast %68 : vector<1x1024xf32> to vector<8x1024xf32>
    %70 = arith.addf %67, %69 : vector<8x1024xf32>
    %cst_24 = arith.constant 0.000000e+00 : f32
    %71 = vector.broadcast %cst_24 : f32 to vector<8x1024xf32>
    %72 = arith.maximumf %70, %71 : vector<8x1024xf32>
    %c6 = arith.constant 6 : index
    %c0_25 = arith.constant 0 : index
    %73 = vector.load %arg1[%c6, %c0_25] : memref<10x1024xf32, #tpu.memory_space<vmem>>, vector<1x1024xf32>
    %74 = vector.shape_cast %73 : vector<1x1024xf32> to vector<1024xf32>
    %c6_26 = arith.constant 6 : index
    %c0_27 = arith.constant 0 : index
    %75 = vector.load %arg2[%c6_26, %c0_27] : memref<10x1024xf32, #tpu.memory_space<vmem>>, vector<1x1024xf32>
    %76 = vector.shape_cast %75 : vector<1x1024xf32> to vector<1024xf32>
    %77 = vector.shape_cast %74 : vector<1024xf32> to vector<1x1024xf32>
    %78 = vector.broadcast %77 : vector<1x1024xf32> to vector<8x1024xf32>
    %79 = arith.mulf %72, %78 : vector<8x1024xf32>
    %80 = vector.shape_cast %76 : vector<1024xf32> to vector<1x1024xf32>
    %81 = vector.broadcast %80 : vector<1x1024xf32> to vector<8x1024xf32>
    %82 = arith.addf %79, %81 : vector<8x1024xf32>
    %cst_28 = arith.constant 0.000000e+00 : f32
    %83 = vector.broadcast %cst_28 : f32 to vector<8x1024xf32>
    %84 = arith.maximumf %82, %83 : vector<8x1024xf32>
    %c7 = arith.constant 7 : index
    %c0_29 = arith.constant 0 : index
    %85 = vector.load %arg1[%c7, %c0_29] : memref<10x1024xf32, #tpu.memory_space<vmem>>, vector<1x1024xf32>
    %86 = vector.shape_cast %85 : vector<1x1024xf32> to vector<1024xf32>
    %c7_30 = arith.constant 7 : index
    %c0_31 = arith.constant 0 : index
    %87 = vector.load %arg2[%c7_30, %c0_31] : memref<10x1024xf32, #tpu.memory_space<vmem>>, vector<1x1024xf32>
    %88 = vector.shape_cast %87 : vector<1x1024xf32> to vector<1024xf32>
    %89 = vector.shape_cast %86 : vector<1024xf32> to vector<1x1024xf32>
    %90 = vector.broadcast %89 : vector<1x1024xf32> to vector<8x1024xf32>
    %91 = arith.mulf %84, %90 : vector<8x1024xf32>
    %92 = vector.shape_cast %88 : vector<1024xf32> to vector<1x1024xf32>
    %93 = vector.broadcast %92 : vector<1x1024xf32> to vector<8x1024xf32>
    %94 = arith.addf %91, %93 : vector<8x1024xf32>
    %cst_32 = arith.constant 0.000000e+00 : f32
    %95 = vector.broadcast %cst_32 : f32 to vector<8x1024xf32>
    %96 = arith.maximumf %94, %95 : vector<8x1024xf32>
    %c8 = arith.constant 8 : index
    %c0_33 = arith.constant 0 : index
    %97 = vector.load %arg1[%c8, %c0_33] : memref<10x1024xf32, #tpu.memory_space<vmem>>, vector<1x1024xf32>
    %98 = vector.shape_cast %97 : vector<1x1024xf32> to vector<1024xf32>
    %c8_34 = arith.constant 8 : index
    %c0_35 = arith.constant 0 : index
    %99 = vector.load %arg2[%c8_34, %c0_35] : memref<10x1024xf32, #tpu.memory_space<vmem>>, vector<1x1024xf32>
    %100 = vector.shape_cast %99 : vector<1x1024xf32> to vector<1024xf32>
    %101 = vector.shape_cast %98 : vector<1024xf32> to vector<1x1024xf32>
    %102 = vector.broadcast %101 : vector<1x1024xf32> to vector<8x1024xf32>
    %103 = arith.mulf %96, %102 : vector<8x1024xf32>
    %104 = vector.shape_cast %100 : vector<1024xf32> to vector<1x1024xf32>
    %105 = vector.broadcast %104 : vector<1x1024xf32> to vector<8x1024xf32>
    %106 = arith.addf %103, %105 : vector<8x1024xf32>
    %cst_36 = arith.constant 0.000000e+00 : f32
    %107 = vector.broadcast %cst_36 : f32 to vector<8x1024xf32>
    %108 = arith.maximumf %106, %107 : vector<8x1024xf32>
    %c9 = arith.constant 9 : index
    %c0_37 = arith.constant 0 : index
    %109 = vector.load %arg1[%c9, %c0_37] : memref<10x1024xf32, #tpu.memory_space<vmem>>, vector<1x1024xf32>
    %110 = vector.shape_cast %109 : vector<1x1024xf32> to vector<1024xf32>
    %c9_38 = arith.constant 9 : index
    %c0_39 = arith.constant 0 : index
    %111 = vector.load %arg2[%c9_38, %c0_39] : memref<10x1024xf32, #tpu.memory_space<vmem>>, vector<1x1024xf32>
    %112 = vector.shape_cast %111 : vector<1x1024xf32> to vector<1024xf32>
    %113 = vector.shape_cast %110 : vector<1024xf32> to vector<1x1024xf32>
    %114 = vector.broadcast %113 : vector<1x1024xf32> to vector<8x1024xf32>
    %115 = arith.mulf %108, %114 : vector<8x1024xf32>
    %116 = vector.shape_cast %112 : vector<1024xf32> to vector<1x1024xf32>
    %117 = vector.broadcast %116 : vector<1x1024xf32> to vector<8x1024xf32>
    %118 = arith.addf %115, %117 : vector<8x1024xf32>
    %c0_40 = arith.constant 0 : index
    %c0_41 = arith.constant 0 : index
    %119 = vector.load %arg4[%c0_40, %c0_41] : memref<8x1024xf32, #tpu.memory_space<vmem>>, vector<8x1024xf32>
    tpu.vector_store %arg4[%c0_40, %c0_41], %118 {strides = array<i32>} : memref<8x1024xf32, #tpu.memory_space<vmem>>, vector<8x1024xf32>,
    return
  }
  func.func @transform_0(%arg0: i32) -> (i32, i32) {
    %c0_i32 = arith.constant 0 : i32
    %c0_i32_0 = arith.constant 0 : i32
    %c0_i32_1 = arith.constant 0 : i32
    return %c0_i32, %c0_i32_0 : i32, i32
  }
  func.func @transform_1(%arg0: i32) -> (i32, i32) {
    %c0_i32 = arith.constant 0 : i32
    %c0_i32_0 = arith.constant 0 : i32
    %c0_i32_1 = arith.constant 0 : i32
    return %c0_i32, %c0_i32_0 : i32, i32
  }
  func.func @transform_2(%arg0: i32) -> (i32, i32) {
    %c0_i32 = arith.constant 0 : i32
    %c0_i32_0 = arith.constant 0 : i32
    return %arg0, %c0_i32 : i32, i32
  }
  func.func @transform_3(%arg0: i32) -> (i32, i32) {
    %c0_i32 = arith.constant 0 : i32
    %c0_i32_0 = arith.constant 0 : i32
    return %arg0, %c0_i32 : i32, i32
  }
}

</mosaic_0001>

<llo_original>
// kernel: tpu_custom_call.1
$region0: #{tpu_custom_call.1}
  #allocation0 [shape = 'u32[]', space=smem, size = 0x4, offset = 0x4, fixed_abs, tag = 'smem constant byte address 0x4 - core index']
  #allocation1 [shape = 'u32[72,128]{1,0:T(1,128)}', space=vmem, size = 0x9000, scoped, tag = 'internal scratch']
  %s0 = inlined_call_operand.hbm [shape: f32[10,1024], index: 0, kind: input, shape index: {}]
  %s1 = inlined_call_operand.hbm [shape: f32[10,1024], index: 1, kind: input, shape index: {}]
  %s2 = inlined_call_operand.hbm [shape: f32[8,1024], index: 2, kind: input, shape index: {}]
  %s3 = inlined_call_operand.hbm [shape: f32[8,1024], index: 3, kind: output, shape index: {}]
  %s4 = sld [smem:[#allocation0]]
  $region34: #{tpu_custom_call.1} parent=0
    _
  %s6 = ssub.s32 1, %s4
  %s7 = scalar_select 0, %s6, %s4
  $region1: #{tpu_custom_call.1} parent=0
    #allocation2 [shape = 'u8[65536]{0}', space=vmem, size = 0x10000, scoped, tag = 'input window, operand 0, single buffered']
    #allocation3 [shape = 's32[1]{0}', space=sflag, size = 0x4, scoped, tag = 'scoped memory for tpu_custom_call.1']
    #allocation4 [shape = 's32[1]{0}', space=sflag, size = 0x4, scoped, tag = 'scoped memory for tpu_custom_call.1']
    #allocation5 [shape = 'u8[65536]{0}', space=vmem, size = 0x10000, scoped, tag = 'input window, operand 1, single buffered']
    #allocation6 [shape = 's32[1]{0}', space=sflag, size = 0x4, scoped, tag = 'scoped memory for tpu_custom_call.1']
    #allocation7 [shape = 'u8[32768]{0}', space=vmem, size = 0x8000, scoped, tag = 'input window, operand 2, single buffered']
    #allocation8 [shape = 'u8[32768]{0}', space=vmem, size = 0x8000, scoped, tag = 'output window, operand 0, single buffered']
    %8 = vsyncpa [#allocation3], 0
    %9 = vsyncpa [#allocation6], 0
    %10 = vsyncpa [#allocation4], 0
    // Predicated region
    $region2: #{tpu_custom_call.1} parent=1 // pred_check
      _
    $region3: #{tpu_custom_call.1} parent=1 // pred_check_branch
      %12 = sbr.rel (0) target = $region5
    $region4: #{tpu_custom_call.1} parent=1 // pred_region
      %14 = vsyncadd [#allocation3], 0
      %s15 = sshll.u32 %s0, 4
      %s16 = int_to_ptr.hbm [resolvable:$true] %s15
      %s17 = sshll.u32 [#allocation2], 4
      %s18 = int_to_ptr.vmem [resolvable:$true] %s17
      %23 = dma.hbm_to_vmem [thread:$0]  %s16, 2048, %s18, [#allocation3], 1024, 1024, 64
    $region5: #{tpu_custom_call.1} parent=1 // pred_fallthru
      _
    // Predicated region
    $region6: #{tpu_custom_call.1} parent=1 // pred_check
      _
    $region7: #{tpu_custom_call.1} parent=1 // pred_check_branch
      %25 = sbr.rel (0) target = $region9
    $region8: #{tpu_custom_call.1} parent=1 // pred_region
      %27 = vsyncadd [#allocation6], 0
      %s28 = sshll.u32 %s1, 4
      %s29 = int_to_ptr.hbm [resolvable:$true] %s28
      %s30 = sshll.u32 [#allocation5], 4
      %s31 = int_to_ptr.vmem [resolvable:$true] %s30
      %36 = dma.hbm_to_vmem [thread:$0]  %s29, 2048, %s31, [#allocation6], 1024, 1024, 64
    $region9: #{tpu_custom_call.1} parent=1 // pred_fallthru
      _
    // Predicated region
    $region10: #{tpu_custom_call.1} parent=1 // pred_check
      _
    $region11: #{tpu_custom_call.1} parent=1 // pred_check_branch
      %38 = sbr.rel (0) target = $region13
    $region12: #{tpu_custom_call.1} parent=1 // pred_region
      %40 = vsyncadd [#allocation6], 0
      %s42 = sshll.u32 %s2, 4
      %s43 = int_to_ptr.hbm [resolvable:$true] %s42
      %s44 = sshll.u32 [#allocation7], 4
      %s45 = int_to_ptr.vmem [resolvable:$true] %s44
      %47 = dma.hbm_to_vmem [thread:$0]  %s43, 1024, %s45, [#allocation6]
    $region13: #{tpu_custom_call.1} parent=1 // pred_fallthru
      _
    // Predicated region
    $region14: #{tpu_custom_call.1} parent=1 // pred_check
      _
    $region15: #{tpu_custom_call.1} parent=1 // pred_check_branch
      %49 = sbr.rel (0) target = $region17
    $region16: #{tpu_custom_call.1} parent=1 // pred_region
      %51 = dma.done [#allocation3], 2048
    $region17: #{tpu_custom_call.1} parent=1 // pred_fallthru
      _
    // Predicated region
    $region18: #{tpu_custom_call.1} parent=1 // pred_check
      _
    $region19: #{tpu_custom_call.1} parent=1 // pred_check_branch
      %53 = sbr.rel (0) target = $region21
    $region20: #{tpu_custom_call.1} parent=1 // pred_region
      %55 = dma.done [#allocation6], 2048
    $region21: #{tpu_custom_call.1} parent=1 // pred_fallthru
      _
    // Predicated region
    $region22: #{tpu_custom_call.1} parent=1 // pred_check
      _
    $region23: #{tpu_custom_call.1} parent=1 // pred_check_branch
      %57 = sbr.rel (0) target = $region25
    $region24: #{tpu_custom_call.1} parent=1 // pred_region
      %59 = dma.done [#allocation6], 1024
    $region25: #{tpu_custom_call.1} parent=1 // pred_fallthru
      _
    %v60 = vld [vmem:[#allocation7] sm:$0xff]
    %v61 = vld [vmem:[#allocation7 + $0x8] sm:$0xff]
    %v62 = vld [vmem:[#allocation7 + $0x10] sm:$0xff]
    %v63 = vld [vmem:[#allocation7 + $0x18] sm:$0xff]
    %v64 = vld [vmem:[#allocation7 + $0x20] sm:$0xff]
    %v65 = vld [vmem:[#allocation7 + $0x28] sm:$0xff]
    %v66 = vld [vmem:[#allocation7 + $0x30] sm:$0xff]
    %v67 = vld [vmem:[#allocation7 + $0x38] sm:$0xff]
    %v68 = vld [vmem:[#allocation2] ss:$8 sm:$0xf]
    %v69 = vld [vmem:[#allocation2] ss:$8 sm:$0xf0]
    %v70 = vor.u32 %v68, %v69
    %v71 = vld [vmem:[#allocation5] ss:$8 sm:$0xf]
    %v72 = vld [vmem:[#allocation5] ss:$8 sm:$0xf0]
    %v73 = vor.u32 %v71, %v72
    %v75 = vperm.slane %v70, 0
    %v76 = vperm.slane %v70, 1
    %v77 = vperm.slane %v70, 2
    %v78 = vperm.slane %v70, 3
    %v79 = vperm.slane %v70, 4
    %v80 = vperm.slane %v70, 5
    %v81 = vperm.slane %v70, 6
    %v82 = vperm.slane %v70, 7
    %v91 = vmul.f32 %v60, %v75
    %v92 = vmul.f32 %v61, %v76
    %v93 = vmul.f32 %v62, %v77
    %v94 = vmul.f32 %v63, %v78
    %v95 = vmul.f32 %v64, %v79
    %v96 = vmul.f32 %v65, %v80
    %v97 = vmul.f32 %v66, %v81
    %v98 = vmul.f32 %v67, %v82
    %v100 = vperm.slane %v73, 0
    %v101 = vperm.slane %v73, 1
    %v102 = vperm.slane %v73, 2
    %v103 = vperm.slane %v73, 3
    %v104 = vperm.slane %v73, 4
    %v105 = vperm.slane %v73, 5
    %v106 = vperm.slane %v73, 6
    %v107 = vperm.slane %v73, 7
    %v116 = vadd.f32 %v91, %v100
    %v117 = vadd.f32 %v92, %v101
    %v118 = vadd.f32 %v93, %v102
    %v119 = vadd.f32 %v94, %v103
    %v120 = vadd.f32 %v95, %v104
    %v121 = vadd.f32 %v96, %v105
    %v122 = vadd.f32 %v97, %v106
    %v123 = vadd.f32 %v98, %v107
    %v124 = vmax.f32 %v116, 0.0
    %v125 = vmax.f32 %v117, 0.0
    %v126 = vmax.f32 %v118, 0.0
    %v127 = vmax.f32 %v119, 0.0
    %v128 = vmax.f32 %v120, 0.0
    %v129 = vmax.f32 %v121, 0.0
    %v130 = vmax.f32 %v122, 0.0
    %v131 = vmax.f32 %v123, 0.0
    %s132 = scalar_lea.vmem [#allocation2], 1
    %v133 = vld [vmem:[%s132] ss:$8 sm:$0xf]
    %v134 = vld [vmem:[%s132] ss:$8 sm:$0xf0]
    %v135 = vor.u32 %v133, %v134
    %s136 = scalar_lea.vmem [#allocation5], 1
    %v137 = vld [vmem:[%s136] ss:$8 sm:$0xf]
    %v138 = vld [vmem:[%s136] ss:$8 sm:$0xf0]
    %v139 = vor.u32 %v137, %v138
    %v141 = vperm.slane %v135, 0
    %v142 = vperm.slane %v135, 1
    %v143 = vperm.slane %v135, 2
    %v144 = vperm.slane %v135, 3
    %v145 = vperm.slane %v135, 4
    %v146 = vperm.slane %v135, 5
    %v147 = vperm.slane %v135, 6
    %v148 = vperm.slane %v135, 7
    %v157 = vmul.f32 %v124, %v141
    %v158 = vmul.f32 %v125, %v142
    %v159 = vmul.f32 %v126, %v143
    %v160 = vmul.f32 %v127, %v144
    %v161 = vmul.f32 %v128, %v145
    %v162 = vmul.f32 %v129, %v146
    %v163 = vmul.f32 %v130, %v147
    %v164 = vmul.f32 %v131, %v148
    %v166 = vperm.slane %v139, 0
    %v167 = vperm.slane %v139, 1
    %v168 = vperm.slane %v139, 2
    %v169 = vperm.slane %v139, 3
    %v170 = vperm.slane %v139, 4
    %v171 = vperm.slane %v139, 5
    %v172 = vperm.slane %v139, 6
    %v173 = vperm.slane %v139, 7
    %v182 = vadd.f32 %v157, %v166
    %v183 = vadd.f32 %v158, %v167
    %v184 = vadd.f32 %v159, %v168
    %v185 = vadd.f32 %v160, %v169
    %v186 = vadd.f32 %v161, %v170
    %v187 = vadd.f32 %v162, %v171
    %v188 = vadd.f32 %v163, %v172
    %v189 = vadd.f32 %v164, %v173
    %v190 = vmax.f32 %v182, 0.0
    %v191 = vmax.f32 %v183, 0.0
    %v192 = vmax.f32 %v184, 0.0
    %v193 = vmax.f32 %v185, 0.0
    %v194 = vmax.f32 %v186, 0.0
    %v195 = vmax.f32 %v187, 0.0
    %v196 = vmax.f32 %v188, 0.0
    %v197 = vmax.f32 %v189, 0.0
    %s198 = scalar_lea.vmem [#allocation2], 2
    %v199 = vld [vmem:[%s198] ss:$8 sm:$0xf]
    %v200 = vld [vmem:[%s198] ss:$8 sm:$0xf0]
    %v201 = vor.u32 %v199, %v200
    %s202 = scalar_lea.vmem [#allocation5], 2
    %v203 = vld [vmem:[%s202] ss:$8 sm:$0xf]
    %v204 = vld [vmem:[%s202] ss:$8 sm:$0xf0]
    %v205 = vor.u32 %v203, %v204
    %v207 = vperm.slane %v201, 0
    %v208 = vperm.slane %v201, 1
    %v209 = vperm.slane %v201, 2
    %v210 = vperm.slane %v201, 3
    %v211 = vperm.slane %v201, 4
    %v212 = vperm.slane %v201, 5
    %v213 = vperm.slane %v201, 6
    %v214 = vperm.slane %v201, 7
    %v223 = vmul.f32 %v190, %v207
    %v224 = vmul.f32 %v191, %v208
    %v225 = vmul.f32 %v192, %v209
    %v226 = vmul.f32 %v193, %v210
    %v227 = vmul.f32 %v194, %v211
    %v228 = vmul.f32 %v195, %v212
    %v229 = vmul.f32 %v196, %v213
    %v230 = vmul.f32 %v197, %v214
    %v232 = vperm.slane %v205, 0
    %v233 = vperm.slane %v205, 1
    %v234 = vperm.slane %v205, 2
    %v235 = vperm.slane %v205, 3
    %v236 = vperm.slane %v205, 4
    %v237 = vperm.slane %v205, 5
    %v238 = vperm.slane %v205, 6
    %v239 = vperm.slane %v205, 7
    %v248 = vadd.f32 %v223, %v232
    %v249 = vadd.f32 %v224, %v233
    %v250 = vadd.f32 %v225, %v234
    %v251 = vadd.f32 %v226, %v235
    %v252 = vadd.f32 %v227, %v236
    %v253 = vadd.f32 %v228, %v237
    %v254 = vadd.f32 %v229, %v238
    %v255 = vadd.f32 %v230, %v239
    %v256 = vmax.f32 %v248, 0.0
    %v257 = vmax.f32 %v249, 0.0
    %v258 = vmax.f32 %v250, 0.0
    %v259 = vmax.f32 %v251, 0.0
    %v260 = vmax.f32 %v252, 0.0
    %v261 = vmax.f32 %v253, 0.0
    %v262 = vmax.f32 %v254, 0.0
    %v263 = vmax.f32 %v255, 0.0
    %s264 = scalar_lea.vmem [#allocation2], 3
    %v265 = vld [vmem:[%s264] ss:$8 sm:$0xf]
    %v266 = vld [vmem:[%s264] ss:$8 sm:$0xf0]
    %v267 = vor.u32 %v265, %v266
    %s268 = scalar_lea.vmem [#allocation5], 3
    %v269 = vld [vmem:[%s268] ss:$8 sm:$0xf]
    %v270 = vld [vmem:[%s268] ss:$8 sm:$0xf0]
    %v271 = vor.u32 %v269, %v270
    %v273 = vperm.slane %v267, 0
    %v274 = vperm.slane %v267, 1
    %v275 = vperm.slane %v267, 2
    %v276 = vperm.slane %v267, 3
    %v277 = vperm.slane %v267, 4
    %v278 = vperm.slane %v267, 5
    %v279 = vperm.slane %v267, 6
    %v280 = vperm.slane %v267, 7
    %v289 = vmul.f32 %v256, %v273
    %v290 = vmul.f32 %v257, %v274
    %v291 = vmul.f32 %v258, %v275
    %v292 = vmul.f32 %v259, %v276
    %v293 = vmul.f32 %v260, %v277
    %v294 = vmul.f32 %v261, %v278
    %v295 = vmul.f32 %v262, %v279
    %v296 = vmul.f32 %v263, %v280
    %v298 = vperm.slane %v271, 0
    %v299 = vperm.slane %v271, 1
    %v300 = vperm.slane %v271, 2
    %v301 = vperm.slane %v271, 3
    %v302 = vperm.slane %v271, 4
    %v303 = vperm.slane %v271, 5
    %v304 = vperm.slane %v271, 6
    %v305 = vperm.slane %v271, 7
    %v314 = vadd.f32 %v289, %v298
    %v315 = vadd.f32 %v290, %v299
    %v316 = vadd.f32 %v291, %v300
    %v317 = vadd.f32 %v292, %v301
    %v318 = vadd.f32 %v293, %v302
    %v319 = vadd.f32 %v294, %v303
    %v320 = vadd.f32 %v295, %v304
    %v321 = vadd.f32 %v296, %v305
    %v322 = vmax.f32 %v314, 0.0
    %v323 = vmax.f32 %v315, 0.0
    %v324 = vmax.f32 %v316, 0.0
    %v325 = vmax.f32 %v317, 0.0
    %v326 = vmax.f32 %v318, 0.0
    %v327 = vmax.f32 %v319, 0.0
    %v328 = vmax.f32 %v320, 0.0
    %v329 = vmax.f32 %v321, 0.0
    %s330 = scalar_lea.vmem [#allocation2], 4
    %v331 = vld [vmem:[%s330] ss:$8 sm:$0xf]
    %v332 = vld [vmem:[%s330] ss:$8 sm:$0xf0]
    %v333 = vor.u32 %v331, %v332
    %s334 = scalar_lea.vmem [#allocation5], 4
    %v335 = vld [vmem:[%s334] ss:$8 sm:$0xf]
    %v336 = vld [vmem:[%s334] ss:$8 sm:$0xf0]
    %v337 = vor.u32 %v335, %v336
    %v339 = vperm.slane %v333, 0
    %v340 = vperm.slane %v333, 1
    %v341 = vperm.slane %v333, 2
    %v342 = vperm.slane %v333, 3
    %v343 = vperm.slane %v333, 4
    %v344 = vperm.slane %v333, 5
    %v345 = vperm.slane %v333, 6
    %v346 = vperm.slane %v333, 7
    %v355 = vmul.f32 %v322, %v339
    %v356 = vmul.f32 %v323, %v340
    %v357 = vmul.f32 %v324, %v341
    %v358 = vmul.f32 %v325, %v342
    %v359 = vmul.f32 %v326, %v343
    %v360 = vmul.f32 %v327, %v344
    %v361 = vmul.f32 %v328, %v345
    %v362 = vmul.f32 %v329, %v346
    %v364 = vperm.slane %v337, 0
    %v365 = vperm.slane %v337, 1
    %v366 = vperm.slane %v337, 2
    %v367 = vperm.slane %v337, 3
    %v368 = vperm.slane %v337, 4
    %v369 = vperm.slane %v337, 5
    %v370 = vperm.slane %v337, 6
    %v371 = vperm.slane %v337, 7
    %v380 = vadd.f32 %v355, %v364
    %v381 = vadd.f32 %v356, %v365
    %v382 = vadd.f32 %v357, %v366
    %v383 = vadd.f32 %v358, %v367
    %v384 = vadd.f32 %v359, %v368
    %v385 = vadd.f32 %v360, %v369
    %v386 = vadd.f32 %v361, %v370
    %v387 = vadd.f32 %v362, %v371
    %v388 = vmax.f32 %v380, 0.0
    %v389 = vmax.f32 %v381, 0.0
    %v390 = vmax.f32 %v382, 0.0
    %v391 = vmax.f32 %v383, 0.0
    %v392 = vmax.f32 %v384, 0.0
    %v393 = vmax.f32 %v385, 0.0
    %v394 = vmax.f32 %v386, 0.0
    %v395 = vmax.f32 %v387, 0.0
    %s396 = scalar_lea.vmem [#allocation2], 5
    %v397 = vld [vmem:[%s396] ss:$8 sm:$0xf]
    %v398 = vld [vmem:[%s396] ss:$8 sm:$0xf0]
    %v399 = vor.u32 %v397, %v398
    %s400 = scalar_lea.vmem [#allocation5], 5
    %v401 = vld [vmem:[%s400] ss:$8 sm:$0xf]
    %v402 = vld [vmem:[%s400] ss:$8 sm:$0xf0]
    %v403 = vor.u32 %v401, %v402
    %v405 = vperm.slane %v399, 0
    %v406 = vperm.slane %v399, 1
    %v407 = vperm.slane %v399, 2
    %v408 = vperm.slane %v399, 3
    %v409 = vperm.slane %v399, 4
    %v410 = vperm.slane %v399, 5
    %v411 = vperm.slane %v399, 6
    %v412 = vperm.slane %v399, 7
    %v421 = vmul.f32 %v388, %v405
    %v422 = vmul.f32 %v389, %v406
    %v423 = vmul.f32 %v390, %v407
    %v424 = vmul.f32 %v391, %v408
    %v425 = vmul.f32 %v392, %v409
    %v426 = vmul.f32 %v393, %v410
    %v427 = vmul.f32 %v394, %v411
    %v428 = vmul.f32 %v395, %v412
    %v430 = vperm.slane %v403, 0
    %v431 = vperm.slane %v403, 1
    %v432 = vperm.slane %v403, 2
    %v433 = vperm.slane %v403, 3
    %v434 = vperm.slane %v403, 4
    %v435 = vperm.slane %v403, 5
    %v436 = vperm.slane %v403, 6
    %v437 = vperm.slane %v403, 7
    %v446 = vadd.f32 %v421, %v430
    %v447 = vadd.f32 %v422, %v431
    %v448 = vadd.f32 %v423, %v432
    %v449 = vadd.f32 %v424, %v433
    %v450 = vadd.f32 %v425, %v434
    %v451 = vadd.f32 %v426, %v435
    %v452 = vadd.f32 %v427, %v436
    %v453 = vadd.f32 %v428, %v437
    %v454 = vmax.f32 %v446, 0.0
    %v455 = vmax.f32 %v447, 0.0
    %v456 = vmax.f32 %v448, 0.0
    %v457 = vmax.f32 %v449, 0.0
    %v458 = vmax.f32 %v450, 0.0
    %v459 = vmax.f32 %v451, 0.0
    %v460 = vmax.f32 %v452, 0.0
    %v461 = vmax.f32 %v453, 0.0
    %s462 = scalar_lea.vmem [#allocation2], 6
    %v463 = vld [vmem:[%s462] ss:$8 sm:$0xf]
    %v464 = vld [vmem:[%s462] ss:$8 sm:$0xf0]
    %v465 = vor.u32 %v463, %v464
    %s466 = scalar_lea.vmem [#allocation5], 6
    %v467 = vld [vmem:[%s466] ss:$8 sm:$0xf]
    %v468 = vld [vmem:[%s466] ss:$8 sm:$0xf0]
    %v469 = vor.u32 %v467, %v468
    %v471 = vperm.slane %v465, 0
    %v472 = vperm.slane %v465, 1
    %v473 = vperm.slane %v465, 2
    %v474 = vperm.slane %v465, 3
    %v475 = vperm.slane %v465, 4
    %v476 = vperm.slane %v465, 5
    %v477 = vperm.slane %v465, 6
    %v478 = vperm.slane %v465, 7
    %v487 = vmul.f32 %v454, %v471
    %v488 = vmul.f32 %v455, %v472
    %v489 = vmul.f32 %v456, %v473
    %v490 = vmul.f32 %v457, %v474
    %v491 = vmul.f32 %v458, %v475
    %v492 = vmul.f32 %v459, %v476
    %v493 = vmul.f32 %v460, %v477
    %v494 = vmul.f32 %v461, %v478
    %v496 = vperm.slane %v469, 0
    %v497 = vperm.slane %v469, 1
    %v498 = vperm.slane %v469, 2
    %v499 = vperm.slane %v469, 3
    %v500 = vperm.slane %v469, 4
    %v501 = vperm.slane %v469, 5
    %v502 = vperm.slane %v469, 6
    %v503 = vperm.slane %v469, 7
    %v512 = vadd.f32 %v487, %v496
    %v513 = vadd.f32 %v488, %v497
    %v514 = vadd.f32 %v489, %v498
    %v515 = vadd.f32 %v490, %v499
    %v516 = vadd.f32 %v491, %v500
    %v517 = vadd.f32 %v492, %v501
    %v518 = vadd.f32 %v493, %v502
    %v519 = vadd.f32 %v494, %v503
    %v520 = vmax.f32 %v512, 0.0
    %v521 = vmax.f32 %v513, 0.0
    %v522 = vmax.f32 %v514, 0.0
    %v523 = vmax.f32 %v515, 0.0
    %v524 = vmax.f32 %v516, 0.0
    %v525 = vmax.f32 %v517, 0.0
    %v526 = vmax.f32 %v518, 0.0
    %v527 = vmax.f32 %v519, 0.0
    %s528 = scalar_lea.vmem [#allocation2], 7
    %v529 = vld [vmem:[%s528] ss:$8 sm:$0xf]
    %v530 = vld [vmem:[%s528] ss:$8 sm:$0xf0]
    %v531 = vor.u32 %v529, %v530
    %s532 = scalar_lea.vmem [#allocation5], 7
    %v533 = vld [vmem:[%s532] ss:$8 sm:$0xf]
    %v534 = vld [vmem:[%s532] ss:$8 sm:$0xf0]
    %v535 = vor.u32 %v533, %v534
    %v537 = vperm.slane %v531, 0
    %v538 = vperm.slane %v531, 1
    %v539 = vperm.slane %v531, 2
    %v540 = vperm.slane %v531, 3
    %v541 = vperm.slane %v531, 4
    %v542 = vperm.slane %v531, 5
    %v543 = vperm.slane %v531, 6
    %v544 = vperm.slane %v531, 7
    %v553 = vmul.f32 %v520, %v537
    %v554 = vmul.f32 %v521, %v538
    %v555 = vmul.f32 %v522, %v539
    %v556 = vmul.f32 %v523, %v540
    %v557 = vmul.f32 %v524, %v541
    %v558 = vmul.f32 %v525, %v542
    %v559 = vmul.f32 %v526, %v543
    %v560 = vmul.f32 %v527, %v544
    %v562 = vperm.slane %v535, 0
    %v563 = vperm.slane %v535, 1
    %v564 = vperm.slane %v535, 2
    %v565 = vperm.slane %v535, 3
    %v566 = vperm.slane %v535, 4
    %v567 = vperm.slane %v535, 5
    %v568 = vperm.slane %v535, 6
    %v569 = vperm.slane %v535, 7
    %v578 = vadd.f32 %v553, %v562
    %v579 = vadd.f32 %v554, %v563
    %v580 = vadd.f32 %v555, %v564
    %v581 = vadd.f32 %v556, %v565
    %v582 = vadd.f32 %v557, %v566
    %v583 = vadd.f32 %v558, %v567
    %v584 = vadd.f32 %v559, %v568
    %v585 = vadd.f32 %v560, %v569
    %v586 = vmax.f32 %v578, 0.0
    %v587 = vmax.f32 %v579, 0.0
    %v588 = vmax.f32 %v580, 0.0
    %v589 = vmax.f32 %v581, 0.0
    %v590 = vmax.f32 %v582, 0.0
    %v591 = vmax.f32 %v583, 0.0
    %v592 = vmax.f32 %v584, 0.0
    %v593 = vmax.f32 %v585, 0.0
    %s594 = scalar_lea.vmem [#allocation2], 64
    %v595 = vld [vmem:[%s594] ss:$8 sm:$0xf]
    %v596 = vld [vmem:[%s594] ss:$8 sm:$0xf0]
    %v597 = vor.u32 %v595, %v596
    %s598 = scalar_lea.vmem [#allocation5], 64
    %v599 = vld [vmem:[%s598] ss:$8 sm:$0xf]
    %v600 = vld [vmem:[%s598] ss:$8 sm:$0xf0]
    %v601 = vor.u32 %v599, %v600
    %v603 = vperm.slane %v597, 0
    %v604 = vperm.slane %v597, 1
    %v605 = vperm.slane %v597, 2
    %v606 = vperm.slane %v597, 3
    %v607 = vperm.slane %v597, 4
    %v608 = vperm.slane %v597, 5
    %v609 = vperm.slane %v597, 6
    %v610 = vperm.slane %v597, 7
    %v619 = vmul.f32 %v586, %v603
    %v620 = vmul.f32 %v587, %v604
    %v621 = vmul.f32 %v588, %v605
    %v622 = vmul.f32 %v589, %v606
    %v623 = vmul.f32 %v590, %v607
    %v624 = vmul.f32 %v591, %v608
    %v625 = vmul.f32 %v592, %v609
    %v626 = vmul.f32 %v593, %v610
    %v628 = vperm.slane %v601, 0
    %v629 = vperm.slane %v601, 1
    %v630 = vperm.slane %v601, 2
    %v631 = vperm.slane %v601, 3
    %v632 = vperm.slane %v601, 4
    %v633 = vperm.slane %v601, 5
    %v634 = vperm.slane %v601, 6
    %v635 = vperm.slane %v601, 7
    %v644 = vadd.f32 %v619, %v628
    %v645 = vadd.f32 %v620, %v629
    %v646 = vadd.f32 %v621, %v630
    %v647 = vadd.f32 %v622, %v631
    %v648 = vadd.f32 %v623, %v632
    %v649 = vadd.f32 %v624, %v633
    %v650 = vadd.f32 %v625, %v634
    %v651 = vadd.f32 %v626, %v635
    %v652 = vmax.f32 %v644, 0.0
    %v653 = vmax.f32 %v645, 0.0
    %v654 = vmax.f32 %v646, 0.0
    %v655 = vmax.f32 %v647, 0.0
    %v656 = vmax.f32 %v648, 0.0
    %v657 = vmax.f32 %v649, 0.0
    %v658 = vmax.f32 %v650, 0.0
    %v659 = vmax.f32 %v651, 0.0
    %s660 = scalar_lea.vmem [#allocation2], 65
    %v661 = vld [vmem:[%s660] ss:$8 sm:$0xf]
    %v662 = vld [vmem:[%s660] ss:$8 sm:$0xf0]
    %v663 = vor.u32 %v661, %v662
    %s664 = scalar_lea.vmem [#allocation5], 65
    %v665 = vld [vmem:[%s664] ss:$8 sm:$0xf]
    %v666 = vld [vmem:[%s664] ss:$8 sm:$0xf0]
    %v667 = vor.u32 %v665, %v666
    %v669 = vperm.slane %v663, 0
    %v670 = vperm.slane %v663, 1
    %v671 = vperm.slane %v663, 2
    %v672 = vperm.slane %v663, 3
    %v673 = vperm.slane %v663, 4
    %v674 = vperm.slane %v663, 5
    %v675 = vperm.slane %v663, 6
    %v676 = vperm.slane %v663, 7
    %v685 = vmul.f32 %v652, %v669
    %v686 = vmul.f32 %v653, %v670
    %v687 = vmul.f32 %v654, %v671
    %v688 = vmul.f32 %v655, %v672
    %v689 = vmul.f32 %v656, %v673
    %v690 = vmul.f32 %v657, %v674
    %v691 = vmul.f32 %v658, %v675
    %v692 = vmul.f32 %v659, %v676
    %v694 = vperm.slane %v667, 0
    %v695 = vperm.slane %v667, 1
    %v696 = vperm.slane %v667, 2
    %v697 = vperm.slane %v667, 3
    %v698 = vperm.slane %v667, 4
    %v699 = vperm.slane %v667, 5
    %v700 = vperm.slane %v667, 6
    %v701 = vperm.slane %v667, 7
    %v710 = vadd.f32 %v685, %v694
    %v711 = vadd.f32 %v686, %v695
    %v712 = vadd.f32 %v687, %v696
    %v713 = vadd.f32 %v688, %v697
    %v714 = vadd.f32 %v689, %v698
    %v715 = vadd.f32 %v690, %v699
    %v716 = vadd.f32 %v691, %v700
    %v717 = vadd.f32 %v692, %v701
    %718 = vst [vmem:[#allocation8] sm:$0xff] %v710
    %719 = vst [vmem:[#allocation8 + $0x8] sm:$0xff] %v711
    %720 = vst [vmem:[#allocation8 + $0x10] sm:$0xff] %v712
    %721 = vst [vmem:[#allocation8 + $0x18] sm:$0xff] %v713
    %722 = vst [vmem:[#allocation8 + $0x20] sm:$0xff] %v714
    %723 = vst [vmem:[#allocation8 + $0x28] sm:$0xff] %v715
    %724 = vst [vmem:[#allocation8 + $0x30] sm:$0xff] %v716
    %725 = vst [vmem:[#allocation8 + $0x38] sm:$0xff] %v717
    // Predicated region
    $region26: #{tpu_custom_call.1} parent=1 // pred_check
      _
    $region27: #{tpu_custom_call.1} parent=1 // pred_check_branch
      %727 = sbr.rel (0) target = $region29
    $region28: #{tpu_custom_call.1} parent=1 // pred_region
      %729 = vsyncadd [#allocation4], 0
      %s731 = sshll.u32 [#allocation8], 4
      %s732 = int_to_ptr.vmem [resolvable:$true] %s731
      %s733 = sshll.u32 %s3, 4
      %s734 = int_to_ptr.hbm [resolvable:$true] %s733
      %736 = dma.vmem_to_hbm [thread:$0]  %s732, 1024, %s734, [#allocation4]
    $region29: #{tpu_custom_call.1} parent=1 // pred_fallthru
      _
    // Predicated region
    $region30: #{tpu_custom_call.1} parent=1 // pred_check
      _
    $region31: #{tpu_custom_call.1} parent=1 // pred_check_branch
      %738 = sbr.rel (0) target = $region33
    $region32: #{tpu_custom_call.1} parent=1 // pred_region
      %740 = dma.done [#allocation4], 1024
    $region33: #{tpu_custom_call.1} parent=1 // pred_fallthru
      _
    %741 = vsyncpa [#allocation3], 1
    %742 = vsyncpa [#allocation6], 1
    %743 = vsyncpa [#allocation4], 1

</llo_original>
